<compile_context>
chip_gen: v7x
topology: tpu7x:2x2x1
jax: 0.10.0
libtpu: 0.0.40
codegen_flags: <defaults>
</compile_context>

<pallas_src>
import functools

import jax
import jax.numpy as jnp
import numpy as np
from jax.experimental import pallas as pl
from jax.experimental.pallas import tpu as pltpu


def _actor_kernel(n_nodes, n_heads, out_dim, approx_recip,
                  x_ref, dt_ref, w1_ref, shift_ref, wdt_ref, wo_ref, bo_ref,
                  out_ref):
    """One batch tile.

    x_ref    : (tb*n_nodes, F)  node features
    dt_ref   : (tb, 6)          [time | dist(4) | 1]
    w1_ref   : (F, H)           lin1 weight with BN scale folded in
    shift_ref: (1, H)           folded BN shift (includes lin1 bias)
    wdt_ref  : (6, 2H)          block-diag [[0,wt],[wd,0],[bd,bt]]
    wo_ref   : (3H, K_pad)      all-head output weights, heads on lanes, 0-padded
    bo_ref   : (1, K_pad)       all-head output biases, 0-padded
    out_ref  : (tb, K_pad)      lane-dense softmax output (padded lanes are 0)
    """
    H = w1_ref.shape[1]
    tb = out_ref.shape[0]
    K = n_heads * out_dim
    K_pad = out_ref.shape[1]

    # ---- lin1 (BN scale/shift + bias folded) + relu over node rows ----
    h = jnp.dot(x_ref[...], w1_ref[...], preferred_element_type=jnp.float32)
    h = jnp.maximum(h + shift_ref[...], 0.0)                       # (tb*N, H)

    # ---- mean over nodes: layout-preserving reshape + mean (no pooling mask) ----
    pooled = jnp.mean(h.reshape(tb, n_nodes, H), axis=1)           # (tb, H)

    # ---- fused lin_dist / lin_time (+ biases via ones column) + relu ----
    dt = jnp.dot(dt_ref[...], wdt_ref[...], preferred_element_type=jnp.float32)
    dt = jnp.maximum(dt, 0.0)                       # (tb, 2H) = [dist_out | time_out]

    # ---- fused output layer: logits for all heads in one (tb, K_pad) slab ----
    logits = (jnp.dot(pooled, wo_ref[0:H, :], preferred_element_type=jnp.float32)
              + jnp.dot(dt, wo_ref[H:3 * H, :], preferred_element_type=jnp.float32)
              + bo_ref[...])

    # ---- per-head softmax assembled in registers, ONE lane-dense block store ----
    parts = []
    for k in range(n_heads):                        # static unroll (few heads)
        lo = k * out_dim
        lk = logits[:, lo:lo + out_dim]
        m = jnp.max(lk, axis=-1, keepdims=True)
        e = jnp.exp(lk - m)
        s = jnp.sum(e, axis=-1, keepdims=True)
        # approx=True (EUP vrcp) in production once the 1e-5 check is relaxed.
        parts.append(e * pl.reciprocal(s, approx=approx_recip))
    if K_pad > K:
        parts.append(jnp.zeros((tb, K_pad - K), jnp.float32))
    out_ref[...] = jnp.concatenate(parts, axis=-1)


def _row_bytes(n_nodes, num_features, hidden_dim, k_pad):
    """Rough f32 VMEM bytes per batch row per grid step (DMA double buffers +
    live intermediates)."""
    return 4 * (2 * n_nodes * num_features          # x tile (double-buffered)
                + n_nodes * hidden_dim              # h
                + 2 * 6                             # dt_in tile
                + 3 * hidden_dim                    # dt + pooled
                + 3 * k_pad)                        # out tile (x2) + logits


def _default_tile_b(batch, n_nodes, num_features, hidden_dim, k_pad,
                    vmem_budget_bytes=12 << 20, min_tiles=2):
    """Largest multiple-of-8 divisor of `batch` that fits the VMEM budget and
    leaves >= min_tiles tiles (so the 1-D parallel grid can use both TCs on v7x)."""
    cap = vmem_budget_bytes // max(_row_bytes(n_nodes, num_features, hidden_dim, k_pad), 1)
    cap = min(int(cap), 2048, max(8, batch // min_tiles))
    cap -= cap % 8
    if cap >= 8:
        for d in range(cap, 7, -8):
            if batch % d == 0:
                return d
    return batch   # tiny or awkward batch: single full-batch tile


def node_mlp_actor_forward(obs, params, *, n_nodes, num_features, hidden_dim,
                           output_dims, tile_b=None, approx_recip=False):
    out_dim = output_dims[0]
    assert all(o == out_dim for o in output_dims), "heads must share out_dim"
    n_heads = len(output_dims)
    H = hidden_dim
    K = n_heads * out_dim
    K_pad = ((K + 127) // 128) * 128               # lane-dense output width

    obs = obs.reshape(-1, 5 + n_nodes * num_features).astype(jnp.float32)
    batch = obs.shape[0]

    if tile_b is None:
        tile_b = _default_tile_b(batch, n_nodes, num_features, H, K_pad)
    assert batch % tile_b == 0, "tile_b must divide batch"
    assert tile_b == batch or tile_b % 8 == 0, "partial tiles need sublane mult of 8"
    num_tiles = batch // tile_b

    # fused dist/time input [time | dist(4) | 1] -> one (B, 6) slab
    dt_in = jnp.concatenate([obs[:, 0:5], jnp.ones((batch, 1), jnp.float32)], axis=1)
    x = obs[:, 5:].reshape(batch * n_nodes, num_features)            # (B*N, F)

    # ---- fold BatchNorm(eval) + lin1 bias into the weights (once, in wrapper) ----
    eps = 1e-5
    scale = params["bn_gamma"] / jnp.sqrt(params["bn_var"] + eps)            # (1, H)
    w1p = params["w1"] * scale                                               # (F, H)
    shift = params["bn_beta"] + (params["b1"] - params["bn_mean"]) * scale   # (1, H)

    # ---- block-diagonal dist/time weights + bias row: (6, 2H) ----
    #   row 0   (time): [0  | wt]
    #   rows1-4 (dist): [wd | 0 ]
    #   row 5   (ones): [bd | bt]
    zH = jnp.zeros((1, H), jnp.float32)
    z4H = jnp.zeros((4, H), jnp.float32)
    wdt = jnp.concatenate([
        jnp.concatenate([zH, params["wt"]], axis=1),
        jnp.concatenate([params["wd"], z4H], axis=1),
        jnp.concatenate([params["bd"], params["bt"]], axis=1),
    ], axis=0)

    # output weights: (n_heads, 3H, out_dim) -> (3H, K), heads on lanes, pad to K_pad
    wo_flat = jnp.transpose(params["wo"], (1, 0, 2)).reshape(3 * H, K)
    wo_flat = jnp.pad(wo_flat, ((0, 0), (0, K_pad - K)))
    bo_flat = jnp.pad(params["bo"].reshape(1, K), ((0, 0), (0, K_pad - K)))

    # compiler params: parallel batch grid; raise scoped VMEM only when needed
    vmem_estimate = (tile_b * _row_bytes(n_nodes, num_features, H, K_pad)
                     + 2 * 4 * (num_features * H + H + 6 * 2 * H
                                + 3 * H * K_pad + K_pad))
    cp_kwargs = dict(dimension_semantics=("parallel",))
    if vmem_estimate > (12 << 20):
        cp_kwargs["vmem_limit_bytes"] = int(min(2 * vmem_estimate, 64 << 20))
    compiler_params = pltpu.CompilerParams(**cp_kwargs)

    out = pl.pallas_call(
        functools.partial(_actor_kernel, n_nodes, n_heads, out_dim, approx_recip),
        out_shape=jax.ShapeDtypeStruct((batch, K_pad), jnp.float32),
        grid=(num_tiles,),
        in_specs=[
            pl.BlockSpec((tile_b * n_nodes, num_features), lambda i: (i, 0)),
            pl.BlockSpec((tile_b, 6), lambda i: (i, 0)),
            pl.BlockSpec((num_features, H), lambda i: (0, 0)),
            pl.BlockSpec((1, H), lambda i: (0, 0)),
            pl.BlockSpec((6, 2 * H), lambda i: (0, 0)),
            pl.BlockSpec((3 * H, K_pad), lambda i: (0, 0)),
            pl.BlockSpec((1, K_pad), lambda i: (0, 0)),
        ],
        out_specs=pl.BlockSpec((tile_b, K_pad), lambda i: (i, 0)),
        compiler_params=compiler_params,
    )(x, dt_in, w1p, shift, wdt, wo_flat, bo_flat)

    # slice the K valid lanes and unpack heads (lane-major head packing)
    return out[:, :K].reshape(batch, n_heads, out_dim)


def _reference_forward(obs, params, *, n_nodes, num_features, hidden_dim,
                       output_dims):
    """Pure-JAX reference mirroring the PyTorch forward (eval mode)."""
    obs = obs.reshape(-1, 5 + n_nodes * num_features).astype(jnp.float32)
    batch = obs.shape[0]
    time_u = obs[:, 0:1]
    dist = obs[:, 1:5]
    x = obs[:, 5:].reshape(-1, num_features)

    x = x @ params["w1"] + params["b1"]
    x = (x - params["bn_mean"]) / jnp.sqrt(params["bn_var"] + 1e-5)
    x = x * params["bn_gamma"] + params["bn_beta"]
    x = jnp.maximum(x, 0.0)
    x = x.reshape(batch, n_nodes, -1).mean(axis=1)

    d = jnp.maximum(dist @ params["wd"] + params["bd"], 0.0)
    t = jnp.maximum(time_u @ params["wt"] + params["bt"], 0.0)
    feat = jnp.concatenate([x, d, t], axis=1)

    outs = []
    for k in range(len(output_dims)):
        logits = feat @ params["wo"][k] + params["bo"][k]
        outs.append(jax.nn.softmax(logits, axis=1)[:, None, :])
    return jnp.concatenate(outs, axis=1)


def _init_params(key, *, num_features, hidden_dim, output_dims):
    """Deterministic synthetic parameters (PyTorch Linear-style uniform init)."""
    out_dim = output_dims[0]
    n_heads = len(output_dims)
    ks = jax.random.split(key, 12)

    def unif(k, shape, fan_in):
        bound = 1.0 / np.sqrt(fan_in)
        return jax.random.uniform(k, shape, jnp.float32, -bound, bound)

    H = hidden_dim
    return {
        "w1": unif(ks[0], (num_features, H), num_features),
        "b1": unif(ks[1], (1, H), num_features),
        "bn_gamma": 1.0 + 0.1 * jax.random.normal(ks[2], (1, H), jnp.float32),
        "bn_beta": 0.1 * jax.random.normal(ks[3], (1, H), jnp.float32),
        "bn_mean": 0.1 * jax.random.normal(ks[4], (1, H), jnp.float32),
        "bn_var": 1.0 + 0.05 * jax.random.uniform(ks[5], (1, H), jnp.float32),
        "wd": unif(ks[6], (4, H), 4),
        "bd": unif(ks[7], (1, H), 4),
        "wt": unif(ks[8], (1, H), 1),
        "bt": unif(ks[9], (1, H), 1),
        "wo": unif(ks[10], (n_heads, 3 * H, out_dim), 3 * H),
        "bo": unif(ks[11], (n_heads, 1, out_dim), 3 * H),
    }


if __name__ == "__main__":
    # Small config consistent with the module's forward.
    batch = 16
    n_nodes = 8
    num_features = 6
    hidden_dim = 32
    output_dims = (5, 5)   # two heads, 5 actions each (must match to cat)
    tile_b = 8             # 2 batch tiles -> exercises the parallel grid

    key = jax.random.PRNGKey(0)
    k_obs, k_par = jax.random.split(key)

    obs = jax.random.normal(
        k_obs, (batch, 5 + n_nodes * num_features), jnp.float32)
    params = _init_params(k_par, num_features=num_features,
                          hidden_dim=hidden_dim, output_dims=output_dims)

    out = node_mlp_actor_forward(
        obs, params, n_nodes=n_nodes, num_features=num_features,
        hidden_dim=hidden_dim, output_dims=output_dims, tile_b=tile_b)
    out = jax.block_until_ready(out)

    ref = _reference_forward(
        obs, params, n_nodes=n_nodes, num_features=num_features,
        hidden_dim=hidden_dim, output_dims=output_dims)

    assert out.shape == (batch, len(output_dims), output_dims[0]), out.shape
    np.testing.assert_allclose(np.asarray(out), np.asarray(ref),
                               rtol=1e-5, atol=1e-5)
    print("KERNEL_OK")
</pallas_src>

<mosaic_0001>
module attributes {stable_mosaic.version = 11 : i64} {
  func.func @_actor_kernel(%arg0: i32, %arg1: memref<64x6xf32, #tpu.memory_space<vmem>>, %arg2: memref<8x6xf32, #tpu.memory_space<vmem>>, %arg3: memref<6x32xf32, #tpu.memory_space<vmem>>, %arg4: memref<1x32xf32, #tpu.memory_space<vmem>>, %arg5: memref<6x64xf32, #tpu.memory_space<vmem>>, %arg6: memref<96x128xf32, #tpu.memory_space<vmem>>, %arg7: memref<1x128xf32, #tpu.memory_space<vmem>>, %arg8: memref<8x128xf32, #tpu.memory_space<vmem>>) attributes {dimension_semantics = [#tpu.dimension_semantics<parallel>], iteration_bounds = array<i64: 2>, scalar_prefetch = 0 : i64, scratch_operands = 0 : i64, tpu.core_type = #tpu.core_type<tc>, window_params = [{transform_indices = @transform_0, window_bounds = array<i64: 64, 6>}, {transform_indices = @transform_1, window_bounds = array<i64: 8, 6>}, {pipeline_mode = #tpu.pipeline_mode<synchronous>, transform_indices = @transform_2, window_bounds = array<i64: 6, 32>}, {pipeline_mode = #tpu.pipeline_mode<synchronous>, transform_indices = @transform_3, window_bounds = array<i64: 1, 32>}, {pipeline_mode = #tpu.pipeline_mode<synchronous>, transform_indices = @transform_4, window_bounds = array<i64: 6, 64>}, {pipeline_mode = #tpu.pipeline_mode<synchronous>, transform_indices = @transform_5, window_bounds = array<i64: 96, 128>}, {pipeline_mode = #tpu.pipeline_mode<synchronous>, transform_indices = @transform_6, window_bounds = array<i64: 1, 128>}, {transform_indices = @transform_7, window_bounds = array<i64: 8, 128>}]} {
    %c0 = arith.constant 0 : index
    %c0_0 = arith.constant 0 : index
    %0 = vector.load %arg1[%c0, %c0_0] : memref<64x6xf32, #tpu.memory_space<vmem>>, vector<64x6xf32>
    %c0_1 = arith.constant 0 : index
    %c0_2 = arith.constant 0 : index
    %1 = vector.load %arg3[%c0_1, %c0_2] : memref<6x32xf32, #tpu.memory_space<vmem>>, vector<6x32xf32>
    %cst = arith.constant dense<0.000000e+00> : vector<64x32xf32>
    %2 = tpu.matmul %0, %1, %cst {dimension_numbers = #tpu.dot_dimension_numbers<[1], [0], [0], [1], [0, 0, 1, 1], [], []>} : vector<64x6xf32>, vector<6x32xf32>, vector<64x32xf32> -> vector<64x32xf32>
    %c0_3 = arith.constant 0 : index
    %c0_4 = arith.constant 0 : index
    %3 = vector.load %arg4[%c0_3, %c0_4] : memref<1x32xf32, #tpu.memory_space<vmem>>, vector<1x32xf32>
    %4 = vector.broadcast %3 : vector<1x32xf32> to vector<64x32xf32>
    %5 = arith.addf %2, %4 : vector<64x32xf32>
    %cst_5 = arith.constant 0.000000e+00 : f32
    %6 = vector.broadcast %cst_5 : f32 to vector<64x32xf32>
    %7 = arith.maximumf %5, %6 : vector<64x32xf32>
    %8 = vector.shape_cast %7 : vector<64x32xf32> to vector<8x8x32xf32>
    %cst_6 = arith.constant dense<0.000000e+00> : vector<8x32xf32>
    %9 = vector.multi_reduction <add>, %8, %cst_6 [1] : vector<8x8x32xf32> to vector<8x32xf32>
    %cst_7 = arith.constant 8.000000e+00 : f32
    %10 = vector.broadcast %cst_7 : f32 to vector<8x32xf32>
    %11 = arith.divf %9, %10 : vector<8x32xf32>
    %c0_8 = arith.constant 0 : index
    %c0_9 = arith.constant 0 : index
    %12 = vector.load %arg2[%c0_8, %c0_9] : memref<8x6xf32, #tpu.memory_space<vmem>>, vector<8x6xf32>
    %c0_10 = arith.constant 0 : index
    %c0_11 = arith.constant 0 : index
    %13 = vector.load %arg5[%c0_10, %c0_11] : memref<6x64xf32, #tpu.memory_space<vmem>>, vector<6x64xf32>
    %cst_12 = arith.constant dense<0.000000e+00> : vector<8x64xf32>
    %14 = tpu.matmul %12, %13, %cst_12 {dimension_numbers = #tpu.dot_dimension_numbers<[1], [0], [0], [1], [0, 0, 1, 1], [], []>} : vector<8x6xf32>, vector<6x64xf32>, vector<8x64xf32> -> vector<8x64xf32>
    %cst_13 = arith.constant 0.000000e+00 : f32
    %15 = vector.broadcast %cst_13 : f32 to vector<8x64xf32>
    %16 = arith.maximumf %14, %15 : vector<8x64xf32>
    %c0_14 = arith.constant 0 : index
    %c0_15 = arith.constant 0 : index
    %17 = vector.load %arg6[%c0_14, %c0_15] : memref<96x128xf32, #tpu.memory_space<vmem>>, vector<32x128xf32>
    %cst_16 = arith.constant dense<0.000000e+00> : vector<8x128xf32>
    %18 = tpu.matmul %11, %17, %cst_16 {dimension_numbers = #tpu.dot_dimension_numbers<[1], [0], [0], [1], [0, 0, 1, 1], [], []>} : vector<8x32xf32>, vector<32x128xf32>, vector<8x128xf32> -> vector<8x128xf32>
    %c32 = arith.constant 32 : index
    %c0_17 = arith.constant 0 : index
    %19 = vector.load %arg6[%c32, %c0_17] : memref<96x128xf32, #tpu.memory_space<vmem>>, vector<64x128xf32>
    %cst_18 = arith.constant dense<0.000000e+00> : vector<8x128xf32>
    %20 = tpu.matmul %16, %19, %cst_18 {dimension_numbers = #tpu.dot_dimension_numbers<[1], [0], [0], [1], [0, 0, 1, 1], [], []>} : vector<8x64xf32>, vector<64x128xf32>, vector<8x128xf32> -> vector<8x128xf32>
    %21 = arith.addf %18, %20 : vector<8x128xf32>
    %c0_19 = arith.constant 0 : index
    %c0_20 = arith.constant 0 : index
    %22 = vector.load %arg7[%c0_19, %c0_20] : memref<1x128xf32, #tpu.memory_space<vmem>>, vector<1x128xf32>
    %23 = vector.broadcast %22 : vector<1x128xf32> to vector<8x128xf32>
    %24 = arith.addf %21, %23 : vector<8x128xf32>
    %25 = vector.extract_strided_slice %24 {offsets = [0, 0], sizes = [8, 5], strides = [1, 1]} : vector<8x128xf32> to vector<8x5xf32>
    %cst_21 = arith.constant dense<0xFF800000> : vector<8xf32>
    %26 = vector.multi_reduction <maximumf>, %25, %cst_21 [1] : vector<8x5xf32> to vector<8xf32>
    %27 = vector.shape_cast %26 : vector<8xf32> to vector<8x1xf32>
    %28 = vector.broadcast %27 : vector<8x1xf32> to vector<8x5xf32>
    %29 = arith.subf %25, %28 : vector<8x5xf32>
    %30 = math.exp %29 : vector<8x5xf32>
    %cst_22 = arith.constant dense<0.000000e+00> : vector<8xf32>
    %31 = vector.multi_reduction <add>, %30, %cst_22 [1] : vector<8x5xf32> to vector<8xf32>
    %32 = vector.shape_cast %31 : vector<8xf32> to vector<8x1xf32>
    %33 = tpu.reciprocal %32 : vector<8x1xf32> -> vector<8x1xf32>
    %34 = vector.broadcast %33 : vector<8x1xf32> to vector<8x5xf32>
    %35 = arith.mulf %30, %34 : vector<8x5xf32>
    %36 = vector.extract_strided_slice %24 {offsets = [0, 5], sizes = [8, 5], strides = [1, 1]} : vector<8x128xf32> to vector<8x5xf32>
    %cst_23 = arith.constant dense<0xFF800000> : vector<8xf32>
    %37 = vector.multi_reduction <maximumf>, %36, %cst_23 [1] : vector<8x5xf32> to vector<8xf32>
    %38 = vector.shape_cast %37 : vector<8xf32> to vector<8x1xf32>
    %39 = vector.broadcast %38 : vector<8x1xf32> to vector<8x5xf32>
    %40 = arith.subf %36, %39 : vector<8x5xf32>
    %41 = math.exp %40 : vector<8x5xf32>
    %cst_24 = arith.constant dense<0.000000e+00> : vector<8xf32>
    %42 = vector.multi_reduction <add>, %41, %cst_24 [1] : vector<8x5xf32> to vector<8xf32>
    %43 = vector.shape_cast %42 : vector<8xf32> to vector<8x1xf32>
    %44 = tpu.reciprocal %43 : vector<8x1xf32> -> vector<8x1xf32>
    %45 = vector.broadcast %44 : vector<8x1xf32> to vector<8x5xf32>
    %46 = arith.mulf %41, %45 : vector<8x5xf32>
    %cst_25 = arith.constant 0.000000e+00 : f32
    %47 = vector.broadcast %cst_25 : f32 to vector<8x118xf32>
    %48 = tpu.concatenate %35, %46, %47 in 1 : vector<8x5xf32>, vector<8x5xf32>, vector<8x118xf32> -> vector<8x128xf32>
    %c0_26 = arith.constant 0 : index
    %c0_27 = arith.constant 0 : index
    %49 = vector.load %arg8[%c0_26, %c0_27] : memref<8x128xf32, #tpu.memory_space<vmem>>, vector<8x128xf32>
    tpu.vector_store %arg8[%c0_26, %c0_27], %48 {strides = array<i32>} : memref<8x128xf32, #tpu.memory_space<vmem>>, vector<8x128xf32>,
    return
  }
  func.func @transform_0(%arg0: i32) -> (i32, i32) {
    %c0_i32 = arith.constant 0 : i32
    %c0_i32_0 = arith.constant 0 : i32
    return %arg0, %c0_i32 : i32, i32
  }
  func.func @transform_1(%arg0: i32) -> (i32, i32) {
    %c0_i32 = arith.constant 0 : i32
    %c0_i32_0 = arith.constant 0 : i32
    return %arg0, %c0_i32 : i32, i32
  }
  func.func @transform_2(%arg0: i32) -> (i32, i32) {
    %c0_i32 = arith.constant 0 : i32
    %c0_i32_0 = arith.constant 0 : i32
    %c0_i32_1 = arith.constant 0 : i32
    return %c0_i32, %c0_i32_0 : i32, i32
  }
  func.func @transform_3(%arg0: i32) -> (i32, i32) {
    %c0_i32 = arith.constant 0 : i32
    %c0_i32_0 = arith.constant 0 : i32
    %c0_i32_1 = arith.constant 0 : i32
    return %c0_i32, %c0_i32_0 : i32, i32
  }
  func.func @transform_4(%arg0: i32) -> (i32, i32) {
    %c0_i32 = arith.constant 0 : i32
    %c0_i32_0 = arith.constant 0 : i32
    %c0_i32_1 = arith.constant 0 : i32
    return %c0_i32, %c0_i32_0 : i32, i32
  }
  func.func @transform_5(%arg0: i32) -> (i32, i32) {
    %c0_i32 = arith.constant 0 : i32
    %c0_i32_0 = arith.constant 0 : i32
    %c0_i32_1 = arith.constant 0 : i32
    return %c0_i32, %c0_i32_0 : i32, i32
  }
  func.func @transform_6(%arg0: i32) -> (i32, i32) {
    %c0_i32 = arith.constant 0 : i32
    %c0_i32_0 = arith.constant 0 : i32
    %c0_i32_1 = arith.constant 0 : i32
    return %c0_i32, %c0_i32_0 : i32, i32
  }
  func.func @transform_7(%arg0: i32) -> (i32, i32) {
    %c0_i32 = arith.constant 0 : i32
    %c0_i32_0 = arith.constant 0 : i32
    return %arg0, %c0_i32 : i32, i32
  }
}

</mosaic_0001>

<llo_original>
// kernel: tpu_custom_call.1
$region0: #{tpu_custom_call.1}
  #allocation0 [shape = 'u32[]', space=smem, size = 0x4, offset = 0x4, fixed_abs, tag = 'smem constant byte address 0x4 - core index']
  #allocation1 [shape = 'u32[144,128]{1,0:T(1,128)}', space=vmem, size = 0x12000, scoped, tag = 'internal scratch']
  %s0 = inlined_call_operand.vmem [shape: f32[128,6], index: 0, kind: input, shape index: {}]
  %s1 = inlined_call_operand.vmem [shape: f32[16,6], index: 1, kind: input, shape index: {}]
  %s2 = inlined_call_operand.vmem [shape: f32[6,32], index: 2, kind: input, shape index: {}]
  %s3 = inlined_call_operand.vmem [shape: f32[1,32], index: 3, kind: input, shape index: {}]
  %s4 = inlined_call_operand.vmem [shape: f32[6,64], index: 4, kind: input, shape index: {}]
  %s5 = inlined_call_operand.vmem [shape: f32[96,128], index: 5, kind: input, shape index: {}]
  %s6 = inlined_call_operand.vmem [shape: f32[1,128], index: 6, kind: input, shape index: {}]
  %s7 = inlined_call_operand.hbm [shape: f32[16,128], index: 7, kind: output, shape index: {}]
  %s8 = sld [smem:[#allocation0]]
  $region61: #{tpu_custom_call.1} parent=0
    _
  %s10 = ssub.s32 1, %s8
  %s11 = scalar_select 0, %s10, %s8
  $region1: #{tpu_custom_call.1} parent=0
    #allocation2 [shape = 'u8[8192]{0}', space=vmem, size = 0x2000, scoped, tag = 'output window, operand 0']
    #allocation3 [shape = 's32[2]{0}', space=sflag, size = 0x8, scoped, tag = 'scoped memory for tpu_custom_call.1']
    %12 = vsyncpa [#allocation3], 0
    %s13 = scalar_lea.sflag [#allocation3], 1
    %14 = vsyncpa %s13, 0
    loop: start=0, step=1, limit=4
    $region2: #{tpu_custom_call.1} parent=1 // loop_pre_header
      _
    $region3: #{tpu_custom_call.1} parent=1 // loop_header
      %s16 = sphi 0, %s20
      %p17 = scmp.ge.s32.totalorder %s16, 4
      %s26 = sphi 0, %s28
      %s29 = sphi 0, %s26
      %s30 = sphi 0, %s29
      %s46 = sphi 0, %s30
      %s52 = sphi 0, %s54
      %s55 = sphi 0, %s52
      %s56 = sphi 0, %s55
      %s72 = sphi 0, %s56
      %s76 = sphi 0, %s76
      %s78 = sphi 0, %s76
      %s79 = sphi 0, %s78
      %s93 = sphi 0, %s79
      %s97 = sphi 0, %s97
      %s99 = sphi 0, %s97
      %s100 = sphi 0, %s99
      %s114 = sphi 0, %s100
      %s118 = sphi 0, %s118
      %s120 = sphi 0, %s118
      %s121 = sphi 0, %s120
      %s135 = sphi 0, %s121
      %s139 = sphi 0, %s139
      %s141 = sphi 0, %s139
      %s142 = sphi 0, %s141
      %s156 = sphi 0, %s142
      %s160 = sphi 0, %s160
      %s162 = sphi 0, %s160
      %s163 = sphi 0, %s162
      %s177 = sphi 0, %s163
      %s183 = sphi 0, %s185
      %s186 = sphi 0, %s183
      %s187 = sphi 0, %s186
      %s203 = sphi 0, %s187
    $region4: #{tpu_custom_call.1} parent=1 // loop_header_branch
      %19 = sbr.rel (%p17) target = $region8
    $region5: #{tpu_custom_call.1} parent=1 // loop_body
      %s21 = ssub.s32 %s16, 1
      %s22 = ssub.s32 %s16, 2
      %s23 = sadd.s32 %s16, 1
      %s24 = ssub.s32 %s16, %s23
      %p25 = scmp.eq.s32.totalorder %s24, 0
      %s27 = sadd.s32 %s26, 1
      %s28 = scalar_select %p25, %s26, %s27
      %p31 = pneg %p25
      %p32 = scmp.eq.s32.totalorder %s16, 1
      %p33 = por %p31, %p32
      %p34 = scmp.ne.s32.totalorder %s26, %s29
      %p35 = scmp.eq.s32.totalorder %s16, 0
      %p36 = por %p34, %p35
      %p37 = scmp.ne.s32.totalorder %s26, %s29
      %p38 = scmp.eq.s32.totalorder %s21, 1
      %p39 = por %p37, %p38
      %p40 = scmp.ne.s32.totalorder %s29, %s30
      %p41 = scmp.eq.s32.totalorder %s21, 0
      %p42 = por %p40, %p41
      %p43 = scmp.ne.s32.totalorder %s29, %s30
      %p44 = scmp.eq.s32.totalorder %s22, 1
      %p45 = por %p43, %p44
      %p47 = scmp.ne.s32.totalorder %s30, %s46
      %p48 = scmp.eq.s32.totalorder %s22, 0
      %p49 = por %p47, %p48
      %s50 = ssub.s32 %s16, %s23
      %p51 = scmp.eq.s32.totalorder %s50, 0
      %s53 = sadd.s32 %s52, 1
      %s54 = scalar_select %p51, %s52, %s53
      %p57 = pneg %p51
      %p58 = scmp.eq.s32.totalorder %s16, 1
      %p59 = por %p57, %p58
      %p60 = scmp.ne.s32.totalorder %s52, %s55
      %p61 = scmp.eq.s32.totalorder %s16, 0
      %p62 = por %p60, %p61
      %p63 = scmp.ne.s32.totalorder %s52, %s55
      %p64 = scmp.eq.s32.totalorder %s21, 1
      %p65 = por %p63, %p64
      %p66 = scmp.ne.s32.totalorder %s55, %s56
      %p67 = scmp.eq.s32.totalorder %s21, 0
      %p68 = por %p66, %p67
      %p69 = scmp.ne.s32.totalorder %s55, %s56
      %p70 = scmp.eq.s32.totalorder %s22, 1
      %p71 = por %p69, %p70
      %p73 = scmp.ne.s32.totalorder %s56, %s72
      %p74 = scmp.eq.s32.totalorder %s22, 0
      %p75 = por %p73, %p74
      %s77 = sadd.s32 %s76, 1
      %p80 = scmp.eq.s32.totalorder %s16, 1
      %p81 = scmp.ne.s32.totalorder %s76, %s78
      %p82 = scmp.eq.s32.totalorder %s16, 0
      %p83 = por %p81, %p82
      %p84 = scmp.ne.s32.totalorder %s76, %s78
      %p85 = scmp.eq.s32.totalorder %s21, 1
      %p86 = por %p84, %p85
      %p87 = scmp.ne.s32.totalorder %s78, %s79
      %p88 = scmp.eq.s32.totalorder %s21, 0
      %p89 = por %p87, %p88
      %p90 = scmp.ne.s32.totalorder %s78, %s79
      %p91 = scmp.eq.s32.totalorder %s22, 1
      %p92 = por %p90, %p91
      %p94 = scmp.ne.s32.totalorder %s79, %s93
      %p95 = scmp.eq.s32.totalorder %s22, 0
      %p96 = por %p94, %p95
      %s98 = sadd.s32 %s97, 1
      %p101 = scmp.eq.s32.totalorder %s16, 1
      %p102 = scmp.ne.s32.totalorder %s97, %s99
      %p103 = scmp.eq.s32.totalorder %s16, 0
      %p104 = por %p102, %p103
      %p105 = scmp.ne.s32.totalorder %s97, %s99
      %p106 = scmp.eq.s32.totalorder %s21, 1
      %p107 = por %p105, %p106
      %p108 = scmp.ne.s32.totalorder %s99, %s100
      %p109 = scmp.eq.s32.totalorder %s21, 0
      %p110 = por %p108, %p109
      %p111 = scmp.ne.s32.totalorder %s99, %s100
      %p112 = scmp.eq.s32.totalorder %s22, 1
      %p113 = por %p111, %p112
      %p115 = scmp.ne.s32.totalorder %s100, %s114
      %p116 = scmp.eq.s32.totalorder %s22, 0
      %p117 = por %p115, %p116
      %s119 = sadd.s32 %s118, 1
      %p122 = scmp.eq.s32.totalorder %s16, 1
      %p123 = scmp.ne.s32.totalorder %s118, %s120
      %p124 = scmp.eq.s32.totalorder %s16, 0
      %p125 = por %p123, %p124
      %p126 = scmp.ne.s32.totalorder %s118, %s120
      %p127 = scmp.eq.s32.totalorder %s21, 1
      %p128 = por %p126, %p127
      %p129 = scmp.ne.s32.totalorder %s120, %s121
      %p130 = scmp.eq.s32.totalorder %s21, 0
      %p131 = por %p129, %p130
      %p132 = scmp.ne.s32.totalorder %s120, %s121
      %p133 = scmp.eq.s32.totalorder %s22, 1
      %p134 = por %p132, %p133
      %p136 = scmp.ne.s32.totalorder %s121, %s135
      %p137 = scmp.eq.s32.totalorder %s22, 0
      %p138 = por %p136, %p137
      %s140 = sadd.s32 %s139, 1
      %p143 = scmp.eq.s32.totalorder %s16, 1
      %p144 = scmp.ne.s32.totalorder %s139, %s141
      %p145 = scmp.eq.s32.totalorder %s16, 0
      %p146 = por %p144, %p145
      %p147 = scmp.ne.s32.totalorder %s139, %s141
      %p148 = scmp.eq.s32.totalorder %s21, 1
      %p149 = por %p147, %p148
      %p150 = scmp.ne.s32.totalorder %s141, %s142
      %p151 = scmp.eq.s32.totalorder %s21, 0
      %p152 = por %p150, %p151
      %p153 = scmp.ne.s32.totalorder %s141, %s142
      %p154 = scmp.eq.s32.totalorder %s22, 1
      %p155 = por %p153, %p154
      %p157 = scmp.ne.s32.totalorder %s142, %s156
      %p158 = scmp.eq.s32.totalorder %s22, 0
      %p159 = por %p157, %p158
      %s161 = sadd.s32 %s160, 1
      %p164 = scmp.eq.s32.totalorder %s16, 1
      %p165 = scmp.ne.s32.totalorder %s160, %s162
      %p166 = scmp.eq.s32.totalorder %s16, 0
      %p167 = por %p165, %p166
      %p168 = scmp.ne.s32.totalorder %s160, %s162
      %p169 = scmp.eq.s32.totalorder %s21, 1
      %p170 = por %p168, %p169
      %p171 = scmp.ne.s32.totalorder %s162, %s163
      %p172 = scmp.eq.s32.totalorder %s21, 0
      %p173 = por %p171, %p172
      %p174 = scmp.ne.s32.totalorder %s162, %s163
      %p175 = scmp.eq.s32.totalorder %s22, 1
      %p176 = por %p174, %p175
      %p178 = scmp.ne.s32.totalorder %s163, %s177
      %p179 = scmp.eq.s32.totalorder %s22, 0
      %p180 = por %p178, %p179
      %s181 = ssub.s32 %s16, %s23
      %p182 = scmp.eq.s32.totalorder %s181, 0
      %s184 = sadd.s32 %s183, 1
      %s185 = scalar_select %p182, %s183, %s184
      %p188 = pneg %p182
      %p189 = scmp.eq.s32.totalorder %s16, 1
      %p190 = por %p188, %p189
      %p191 = scmp.ne.s32.totalorder %s183, %s186
      %p192 = scmp.eq.s32.totalorder %s16, 0
      %p193 = por %p191, %p192
      %p194 = scmp.ne.s32.totalorder %s183, %s186
      %p195 = scmp.eq.s32.totalorder %s21, 1
      %p196 = por %p194, %p195
      %p197 = scmp.ne.s32.totalorder %s186, %s187
      %p198 = scmp.eq.s32.totalorder %s21, 0
      %p199 = por %p197, %p198
      %p200 = scmp.ne.s32.totalorder %s186, %s187
      %p201 = scmp.eq.s32.totalorder %s22, 1
      %p202 = por %p200, %p201
      %p204 = scmp.ne.s32.totalorder %s187, %s203
      %p205 = scmp.eq.s32.totalorder %s22, 0
      %p206 = por %p204, %p205
      %p207 = scmp.le.s32.totalorder 1, %s16
      %p208 = scmp.lt.s32.totalorder %s16, 3
      %p209 = pnand %p207, %p208
      %p210 = pneg %p209
      // Predicated region
      $region9: #{tpu_custom_call.1} parent=5 // pred_check
        _
      $region10: #{tpu_custom_call.1} parent=5 // pred_check_branch
        %212 = sbr.rel (%p209) target = $region12
      $region11: #{tpu_custom_call.1} parent=5 // pred_region
        %s213 = ssub.s32 %s16, 1
        // Predicated region
        $region13: #{tpu_custom_call.1} parent=11 // pred_check
          %p214 = pneg %p89
        $region14: #{tpu_custom_call.1} parent=11 // pred_check_branch
          %216 = sbr.rel (%p214) target = $region16
        $region15: #{tpu_custom_call.1} parent=11 // pred_region
          _
        $region16: #{tpu_custom_call.1} parent=11 // pred_fallthru
          _
        // Predicated region
        $region17: #{tpu_custom_call.1} parent=11 // pred_check
          %p217 = pneg %p110
        $region18: #{tpu_custom_call.1} parent=11 // pred_check_branch
          %219 = sbr.rel (%p217) target = $region20
        $region19: #{tpu_custom_call.1} parent=11 // pred_region
          _
        $region20: #{tpu_custom_call.1} parent=11 // pred_fallthru
          _
        // Predicated region
        $region21: #{tpu_custom_call.1} parent=11 // pred_check
          %p220 = pneg %p131
        $region22: #{tpu_custom_call.1} parent=11 // pred_check_branch
          %222 = sbr.rel (%p220) target = $region24
        $region23: #{tpu_custom_call.1} parent=11 // pred_region
          _
        $region24: #{tpu_custom_call.1} parent=11 // pred_fallthru
          _
        // Predicated region
        $region25: #{tpu_custom_call.1} parent=11 // pred_check
          %p223 = pneg %p152
        $region26: #{tpu_custom_call.1} parent=11 // pred_check_branch
          %225 = sbr.rel (%p223) target = $region28
        $region27: #{tpu_custom_call.1} parent=11 // pred_region
          _
        $region28: #{tpu_custom_call.1} parent=11 // pred_fallthru
          _
        // Predicated region
        $region29: #{tpu_custom_call.1} parent=11 // pred_check
          %p226 = pneg %p173
        $region30: #{tpu_custom_call.1} parent=11 // pred_check_branch
          %228 = sbr.rel (%p226) target = $region32
        $region31: #{tpu_custom_call.1} parent=11 // pred_region
          _
        $region32: #{tpu_custom_call.1} parent=11 // pred_fallthru
          _
      $region12: #{tpu_custom_call.1} parent=5 // pred_fallthru
        _
      %p229 = scmp.lt.s32.totalorder %s16, 2
      // Predicated region
      $region33: #{tpu_custom_call.1} parent=5 // pred_check
        %p230 = pneg %p229
      $region34: #{tpu_custom_call.1} parent=5 // pred_check_branch
        %232 = sbr.rel (%p230) target = $region36
      $region35: #{tpu_custom_call.1} parent=5 // pred_region
        // Predicated region
        $region37: #{tpu_custom_call.1} parent=35 // pred_check
          %p233 = pneg %p36
        $region38: #{tpu_custom_call.1} parent=35 // pred_check_branch
          %235 = sbr.rel (%p233) target = $region40
        $region39: #{tpu_custom_call.1} parent=35 // pred_region
          %s236 = smul.u32 8, %s16
          %p237 = scmp.lt.s32.totalorder %s236, 15
          %s238 = scalar_select %p237, %s236, 15
          %s239 = smul.addr %s238, 8
          %s240 = scalar_lea.vmem %s0, %s239
          %s241 = smul.u32 8, %s16
        $region40: #{tpu_custom_call.1} parent=35 // pred_fallthru
          _
        // Predicated region
        $region41: #{tpu_custom_call.1} parent=35 // pred_check
          %p242 = pneg %p62
        $region42: #{tpu_custom_call.1} parent=35 // pred_check_branch
          %244 = sbr.rel (%p242) target = $region44
        $region43: #{tpu_custom_call.1} parent=35 // pred_region
          %p245 = scmp.lt.s32.totalorder %s16, 1
          %s246 = scalar_select %p245, %s16, 1
          %s247 = smul.addr %s246, 8
          %s248 = scalar_lea.vmem %s1, %s247
        $region44: #{tpu_custom_call.1} parent=35 // pred_fallthru
          _
      $region36: #{tpu_custom_call.1} parent=5 // pred_fallthru
        _
      %p249 = scmp.le.s32.totalorder 1, %s16
      %p250 = scmp.lt.s32.totalorder %s16, 3
      %p251 = pnand %p249, %p250
      %p252 = pneg %p251
      // Predicated region
      $region45: #{tpu_custom_call.1} parent=5 // pred_check
        _
      $region46: #{tpu_custom_call.1} parent=5 // pred_check_branch
        %254 = sbr.rel (%p251) target = $region48
      $region47: #{tpu_custom_call.1} parent=5 // pred_region
        %s255 = ssub.s32 %s16, 1
        %s256 = smul.u32 8, %s21
        %p257 = scmp.lt.s32.totalorder %s256, 15
        %s258 = scalar_select %p257, %s256, 15
        %s259 = smul.addr %s258, 8
        %s260 = scalar_lea.vmem %s0, %s259
        %p261 = pneg %p42
        %p262 = pneg %p39
        %p263 = scmp.lt.s32.totalorder %s21, 1
        %s264 = scalar_select %p263, %s21, 1
        %s265 = smul.addr %s264, 8
        %s266 = scalar_lea.vmem %s1, %s265
        %p267 = pneg %p68
        %p268 = pneg %p65
        %p269 = pneg %p89
        %p270 = pneg %p86
        %p271 = pneg %p110
        %p272 = pneg %p107
        %p273 = pneg %p131
        %p274 = pneg %p128
        %p275 = pneg %p152
        %p276 = pneg %p149
        %p277 = pneg %p173
        %p278 = pneg %p170
        %p279 = pneg %p199
        %p280 = pneg %p196
        %s281 = sand.u32 %s186, 1
        %s282 = scalar_lea.sflag [#allocation3], %s281
        %s283 = sand.u32 %s186, 1
        %s284 = smul.addr %s283, 8
        %s285 = scalar_lea.vmem [#allocation2], %s284
        %s286 = smul.u32 8, %s21
        %p287 = scmp.lt.s32.totalorder %s286, 15
        %s288 = scalar_select %p287, %s286, 15
        %s289 = smul.addr %s288, 8
        %s290 = scalar_lea.vmem %s0, %s289
        %s291 = smul.u32 8, %s21
        %p292 = scmp.lt.s32.totalorder %s21, 1
        %s293 = scalar_select %p292, %s21, 1
        %s294 = smul.addr %s293, 8
        %s295 = scalar_lea.vmem %s1, %s294
        %v296 = vld [vmem:[%s290] sm:$0xff]
        %v297 = vld [vmem:[%s290 + $0x8] sm:$0xff]
        %v298 = vld [vmem:[%s290 + $0x10] sm:$0xff]
        %v299 = vld [vmem:[%s290 + $0x18] sm:$0xff]
        %v300 = vld [vmem:[%s290 + $0x20] sm:$0xff]
        %v301 = vld [vmem:[%s290 + $0x28] sm:$0xff]
        %v302 = vld [vmem:[%s290 + $0x30] sm:$0xff]
        %v303 = vld [vmem:[%s290 + $0x38] sm:$0xff]
        %v304 = vld [vmem:[%s2] sm:$0x3f]
        %v305 = vld [vmem:[%s3] sm:$0x1]
        %v307 = vlaneseq
        %v308 = vshrl.u32 %v307, 7
        %v309 = vsub.s32 0, %v308
        %v310 = vrot.slane %v305, %v309
        %vm312 = vcmask 48128
        %v314 = vsel %vm312, %v296, 0
        %v317 = vsel %vm312, %v297, 0
        %v320 = vsel %vm312, %v298, 0
        %v323 = vsel %vm312, %v299, 0
        %v326 = vsel %vm312, %v300, 0
        %v329 = vsel %vm312, %v301, 0
        %v332 = vsel %vm312, %v302, 0
        %v335 = vsel %vm312, %v303, 0
        %vm337 = vcmask 1045504
        %v339 = vsel %vm337, %v304, 0
        %341 = vmatprep.subr.mxu0 0.0
        %342 = vmatpush1.msra.mxu0 %v339
        %343 = vmatprep.subr.mxu0 0.0
        %344 = vmatpush1.msra.mxu0 0.0
        %345 = vmatprep.subr.mxu0 0.0
        %346 = vmatpush1.msra.mxu0 0.0
        %347 = vmatprep.subr.mxu0 0.0
        %348 = vmatpush1.msra.mxu0 0.0
        %349 = vmatprep.subr.mxu0 0.0
        %350 = vmatpush1.msra.mxu0 0.0
        %351 = vmatprep.subr.mxu0 0.0
        %352 = vmatpush1.msra.mxu0 0.0
        %353 = vmatprep.subr.mxu0 0.0
        %354 = vmatpush1.msra.mxu0 0.0
        %355 = vmatprep.subr.mxu0 0.0
        %356 = vmatpush1.msra.mxu0 0.0
        %357 = vmatprep.subr.mxu0 0.0
        %358 = vmatpush1.msra.mxu0 0.0
        %359 = vmatprep.subr.mxu0 0.0
        %360 = vmatpush1.msra.mxu0 0.0
        %361 = vmatprep.subr.mxu0 0.0
        %362 = vmatpush1.msra.mxu0 0.0
        %363 = vmatprep.subr.mxu0 0.0
        %364 = vmatpush1.msra.mxu0 0.0
        %365 = vmatprep.subr.mxu0 0.0
        %366 = vmatpush1.msra.mxu0 0.0
        %367 = vmatprep.subr.mxu0 0.0
        %368 = vmatpush1.msra.mxu0 0.0
        %369 = vmatprep.subr.mxu0 0.0
        %370 = vmatpush1.msra.mxu0 0.0
        %371 = vmatprep.subr.mxu0 0.0
        %372 = vmatpush1.msra.mxu0 0.0
        %373 = vmatprep.subr.mxu0 0.0
        %374 = vmatpush1.msra.mxu0 0.0
        %375 = vmatprep.subr.mxu0 0.0
        %376 = vmatpush1.msra.mxu0 0.0
        %377 = vmatprep.subr.mxu0 0.0
        %378 = vmatpush1.msra.mxu0 0.0
        %379 = vmatprep.subr.mxu0 0.0
        %380 = vmatpush1.msra.mxu0 0.0
        %381 = vmatprep.subr.mxu0 0.0
        %382 = vmatpush1.msra.mxu0 0.0
        %383 = vmatprep.subr.mxu0 0.0
        %384 = vmatpush1.msra.mxu0 0.0
        %385 = vmatprep.subr.mxu0 0.0
        %386 = vmatpush1.msra.mxu0 0.0
        %387 = vmatprep.subr.mxu0 0.0
        %388 = vmatpush1.msra.mxu0 0.0
        %389 = vmatprep.subr.mxu0 0.0
        %390 = vmatpush1.msra.mxu0 0.0
        %391 = vmatprep.subr.mxu0 0.0
        %392 = vmatpush1.msra.mxu0 0.0
        %393 = vmatprep.subr.mxu0 0.0
        %394 = vmatpush1.msra.mxu0 0.0
        %395 = vmatprep.subr.mxu0 0.0
        %396 = vmatpush1.msra.mxu0 0.0
        %397 = vmatprep.subr.mxu0 0.0
        %398 = vmatpush1.msra.mxu0 0.0
        %399 = vmatprep.subr.mxu0 0.0
        %400 = vmatpush1.msra.mxu0 0.0
        %401 = vmatprep.subr.mxu0 0.0
        %402 = vmatpush1.msra.mxu0 0.0
        %403 = vmatprep.subr.mxu0 0.0
        %404 = vmatpush1.msra.mxu0 0.0
        %405 = vmatprep.mubr.f32.mxu0 0.0
        %406 = vmatmul.mubr.f32.gmra.mrb[0].mxu0 %v314
        %v407 = vpop.f32.mrb[0].mxu0
        %v408 = vadd.f32 %v310, %v407
        %v409 = vpop.f32.mrb[0].mxu0
        %410 = vmatprep.mubr.f32.mxu0 0.0
        %411 = vmatmul.mubr.f32.gmra.mrb[0].mxu0 %v317
        %v412 = vpop.f32.mrb[0].mxu0
        %v413 = vadd.f32 %v310, %v412
        %v414 = vpop.f32.mrb[0].mxu0
        %415 = vmatprep.mubr.f32.mxu0 0.0
        %416 = vmatmul.mubr.f32.gmra.mrb[0].mxu0 %v320
        %v417 = vpop.f32.mrb[0].mxu0
        %v418 = vadd.f32 %v310, %v417
        %v419 = vpop.f32.mrb[0].mxu0
        %420 = vmatprep.mubr.f32.mxu0 0.0
        %421 = vmatmul.mubr.f32.gmra.mrb[0].mxu0 %v323
        %v422 = vpop.f32.mrb[0].mxu0
        %v423 = vadd.f32 %v310, %v422
        %v424 = vpop.f32.mrb[0].mxu0
        %425 = vmatprep.mubr.f32.mxu0 0.0
        %426 = vmatmul.mubr.f32.gmra.mrb[0].mxu0 %v326
        %v427 = vpop.f32.mrb[0].mxu0
        %v428 = vadd.f32 %v310, %v427
        %v429 = vpop.f32.mrb[0].mxu0
        %430 = vmatprep.mubr.f32.mxu0 0.0
        %431 = vmatmul.mubr.f32.gmra.mrb[0].mxu0 %v329
        %v432 = vpop.f32.mrb[0].mxu0
        %v433 = vadd.f32 %v310, %v432
        %v434 = vpop.f32.mrb[0].mxu0
        %435 = vmatprep.mubr.f32.mxu0 0.0
        %436 = vmatmul.mubr.f32.gmra.mrb[0].mxu0 %v332
        %v437 = vpop.f32.mrb[0].mxu0
        %v438 = vadd.f32 %v310, %v437
        %v439 = vpop.f32.mrb[0].mxu0
        %440 = vmatprep.mubr.f32.mxu0 0.0
        %441 = vmatmul.mubr.f32.gmra.mrb[0].mxu0 %v335
        %v442 = vpop.f32.mrb[0].mxu0
        %v443 = vadd.f32 %v310, %v442
        %v444 = vpop.f32.mrb[0].mxu0
        %445 = vdwg.mxu0
        %v446 = vmax.f32 %v408, 0.0
        %v447 = vmax.f32 %v413, 0.0
        %v448 = vmax.f32 %v418, 0.0
        %v449 = vmax.f32 %v423, 0.0
        %v450 = vmax.f32 %v428, 0.0
        %v451 = vmax.f32 %v433, 0.0
        %v452 = vmax.f32 %v438, 0.0
        %v453 = vmax.f32 %v443, 0.0
        %vm454 = vcmask 261120
        %v455 = vsel %vm454, %v446, 0.0
        %v456 = vrot.slane %v455, 4
        %v457 = vadd.f32 %v455, %v456
        %v458 = vrot.slane %v457, 2
        %v459 = vadd.f32 %v457, %v458
        %v460 = vrot.slane %v459, 1
        %v461 = vadd.f32 %v459, %v460
        %v462 = vsel %vm454, %v447, 0.0
        %v463 = vrot.slane %v462, 4
        %v464 = vadd.f32 %v462, %v463
        %v465 = vrot.slane %v464, 2
        %v466 = vadd.f32 %v464, %v465
        %v467 = vrot.slane %v466, 1
        %v468 = vadd.f32 %v466, %v467
        %v469 = vsel %vm454, %v448, 0.0
        %v470 = vrot.slane %v469, 4
        %v471 = vadd.f32 %v469, %v470
        %v472 = vrot.slane %v471, 2
        %v473 = vadd.f32 %v471, %v472
        %v474 = vrot.slane %v473, 1
        %v475 = vadd.f32 %v473, %v474
        %v476 = vsel %vm454, %v449, 0.0
        %v477 = vrot.slane %v476, 4
        %v478 = vadd.f32 %v476, %v477
        %v479 = vrot.slane %v478, 2
        %v480 = vadd.f32 %v478, %v479
        %v481 = vrot.slane %v480, 1
        %v482 = vadd.f32 %v480, %v481
        %v483 = vsel %vm454, %v450, 0.0
        %v484 = vrot.slane %v483, 4
        %v485 = vadd.f32 %v483, %v484
        %v486 = vrot.slane %v485, 2
        %v487 = vadd.f32 %v485, %v486
        %v488 = vrot.slane %v487, 1
        %v489 = vadd.f32 %v487, %v488
        %v490 = vsel %vm454, %v451, 0.0
        %v491 = vrot.slane %v490, 4
        %v492 = vadd.f32 %v490, %v491
        %v493 = vrot.slane %v492, 2
        %v494 = vadd.f32 %v492, %v493
        %v495 = vrot.slane %v494, 1
        %v496 = vadd.f32 %v494, %v495
        %v497 = vsel %vm454, %v452, 0.0
        %v498 = vrot.slane %v497, 4
        %v499 = vadd.f32 %v497, %v498
        %v500 = vrot.slane %v499, 2
        %v501 = vadd.f32 %v499, %v500
        %v502 = vrot.slane %v501, 1
        %v503 = vadd.f32 %v501, %v502
        %v504 = vsel %vm454, %v453, 0.0
        %v505 = vrot.slane %v504, 4
        %v506 = vadd.f32 %v504, %v505
        %v507 = vrot.slane %v506, 2
        %v508 = vadd.f32 %v506, %v507
        %v509 = vrot.slane %v508, 1
        %v510 = vadd.f32 %v508, %v509
        %v511 = vrcp.pop 8.0
        %v512 = vmul.f32 %v461, %v511
        %v513 = vmul.f32 %v468, %v511
        %v514 = vmul.f32 %v475, %v511
        %v515 = vmul.f32 %v482, %v511
        %v516 = vmul.f32 %v489, %v511
        %v517 = vmul.f32 %v496, %v511
        %v518 = vmul.f32 %v503, %v511
        %v519 = vmul.f32 %v510, %v511
        %v520 = vld [vmem:[%s295] sm:$0xff]
        %v521 = vld [vmem:[%s4] sm:$0x3f]
        %v523 = vsel %vm312, %v520, 0
        %v526 = vsel %vm337, %v521, 0
        %528 = vmatprep.subr.mxu0 0.0
        %529 = vmatpush1.msra.mxu0 %v526
        %530 = vmatprep.subr.mxu0 0.0
        %531 = vmatpush1.msra.mxu0 0.0
        %532 = vmatprep.subr.mxu0 0.0
        %533 = vmatpush1.msra.mxu0 0.0
        %534 = vmatprep.subr.mxu0 0.0
        %535 = vmatpush1.msra.mxu0 0.0
        %536 = vmatprep.subr.mxu0 0.0
        %537 = vmatpush1.msra.mxu0 0.0
        %538 = vmatprep.subr.mxu0 0.0
        %539 = vmatpush1.msra.mxu0 0.0
        %540 = vmatprep.subr.mxu0 0.0
        %541 = vmatpush1.msra.mxu0 0.0
        %542 = vmatprep.subr.mxu0 0.0
        %543 = vmatpush1.msra.mxu0 0.0
        %544 = vmatprep.subr.mxu0 0.0
        %545 = vmatpush1.msra.mxu0 0.0
        %546 = vmatprep.subr.mxu0 0.0
        %547 = vmatpush1.msra.mxu0 0.0
        %548 = vmatprep.subr.mxu0 0.0
        %549 = vmatpush1.msra.mxu0 0.0
        %550 = vmatprep.subr.mxu0 0.0
        %551 = vmatpush1.msra.mxu0 0.0
        %552 = vmatprep.subr.mxu0 0.0
        %553 = vmatpush1.msra.mxu0 0.0
        %554 = vmatprep.subr.mxu0 0.0
        %555 = vmatpush1.msra.mxu0 0.0
        %556 = vmatprep.subr.mxu0 0.0
        %557 = vmatpush1.msra.mxu0 0.0
        %558 = vmatprep.subr.mxu0 0.0
        %559 = vmatpush1.msra.mxu0 0.0
        %560 = vmatprep.subr.mxu0 0.0
        %561 = vmatpush1.msra.mxu0 0.0
        %562 = vmatprep.subr.mxu0 0.0
        %563 = vmatpush1.msra.mxu0 0.0
        %564 = vmatprep.subr.mxu0 0.0
        %565 = vmatpush1.msra.mxu0 0.0
        %566 = vmatprep.subr.mxu0 0.0
        %567 = vmatpush1.msra.mxu0 0.0
        %568 = vmatprep.subr.mxu0 0.0
        %569 = vmatpush1.msra.mxu0 0.0
        %570 = vmatprep.subr.mxu0 0.0
        %571 = vmatpush1.msra.mxu0 0.0
        %572 = vmatprep.subr.mxu0 0.0
        %573 = vmatpush1.msra.mxu0 0.0
        %574 = vmatprep.subr.mxu0 0.0
        %575 = vmatpush1.msra.mxu0 0.0
        %576 = vmatprep.subr.mxu0 0.0
        %577 = vmatpush1.msra.mxu0 0.0
        %578 = vmatprep.subr.mxu0 0.0
        %579 = vmatpush1.msra.mxu0 0.0
        %580 = vmatprep.subr.mxu0 0.0
        %581 = vmatpush1.msra.mxu0 0.0
        %582 = vmatprep.subr.mxu0 0.0
        %583 = vmatpush1.msra.mxu0 0.0
        %584 = vmatprep.subr.mxu0 0.0
        %585 = vmatpush1.msra.mxu0 0.0
        %586 = vmatprep.subr.mxu0 0.0
        %587 = vmatpush1.msra.mxu0 0.0
        %588 = vmatprep.subr.mxu0 0.0
        %589 = vmatpush1.msra.mxu0 0.0
        %590 = vmatprep.subr.mxu0 0.0
        %591 = vmatpush1.msra.mxu0 0.0
        %592 = vmatprep.mubr.f32.mxu0 0.0
        %593 = vmatmul.mubr.f32.gmra.mrb[0].mxu0 %v523
        %v594 = vpop.f32.mrb[0].mxu0
        %v595 = vadd.f32 0.0, %v594
        %v596 = vpop.f32.mrb[0].mxu0
        %597 = vdwg.mxu0
        %v598 = vmax.f32 %v595, 0.0
        %v599 = vld [vmem:[%s5] sm:$0xff]
        %v600 = vld [vmem:[%s5 + $0x8] sm:$0xff]
        %v601 = vld [vmem:[%s5 + $0x10] sm:$0xff]
        %v602 = vld [vmem:[%s5 + $0x18] sm:$0xff]
        %v603 = vld [vmem:[%s5 + $0x20] sm:$0xff]
        %v604 = vld [vmem:[%s5 + $0x28] sm:$0xff]
        %v605 = vld [vmem:[%s5 + $0x30] sm:$0xff]
        %v606 = vld [vmem:[%s5 + $0x38] sm:$0xff]
        %v607 = vld [vmem:[%s5 + $0x40] sm:$0xff]
        %v608 = vld [vmem:[%s5 + $0x48] sm:$0xff]
        %v609 = vld [vmem:[%s5 + $0x50] sm:$0xff]
        %v610 = vld [vmem:[%s5 + $0x58] sm:$0xff]
        %vm611 = vcmask 523264
        %v613 = vsel %vm611, %v598, 0
        %615 = vmatprep.subr.mxu0 0.0
        %616 = vmatpush1.msra.mxu0 %v603
        %617 = vmatprep.subr.mxu0 0.0
        %618 = vmatpush1.msra.mxu0 %v604
        %619 = vmatprep.subr.mxu0 0.0
        %620 = vmatpush1.msra.mxu0 %v605
        %621 = vmatprep.subr.mxu0 0.0
        %622 = vmatpush1.msra.mxu0 %v606
        %623 = vmatprep.subr.mxu0 0.0
        %624 = vmatpush1.msra.mxu0 %v607
        %625 = vmatprep.subr.mxu0 0.0
        %626 = vmatpush1.msra.mxu0 %v608
        %627 = vmatprep.subr.mxu0 0.0
        %628 = vmatpush1.msra.mxu0 %v609
        %629 = vmatprep.subr.mxu0 0.0
        %630 = vmatpush1.msra.mxu0 %v610
        %631 = vmatprep.subr.mxu0 0.0
        %632 = vmatpush1.msra.mxu0 0.0
        %633 = vmatprep.subr.mxu0 0.0
        %634 = vmatpush1.msra.mxu0 0.0
        %635 = vmatprep.subr.mxu0 0.0
        %636 = vmatpush1.msra.mxu0 0.0
        %637 = vmatprep.subr.mxu0 0.0
        %638 = vmatpush1.msra.mxu0 0.0
        %639 = vmatprep.subr.mxu0 0.0
        %640 = vmatpush1.msra.mxu0 0.0
        %641 = vmatprep.subr.mxu0 0.0
        %642 = vmatpush1.msra.mxu0 0.0
        %643 = vmatprep.subr.mxu0 0.0
        %644 = vmatpush1.msra.mxu0 0.0
        %645 = vmatprep.subr.mxu0 0.0
        %646 = vmatpush1.msra.mxu0 0.0
        %647 = vmatprep.subr.mxu0 0.0
        %648 = vmatpush1.msra.mxu0 0.0
        %649 = vmatprep.subr.mxu0 0.0
        %650 = vmatpush1.msra.mxu0 0.0
        %651 = vmatprep.subr.mxu0 0.0
        %652 = vmatpush1.msra.mxu0 0.0
        %653 = vmatprep.subr.mxu0 0.0
        %654 = vmatpush1.msra.mxu0 0.0
        %655 = vmatprep.subr.mxu0 0.0
        %656 = vmatpush1.msra.mxu0 0.0
        %657 = vmatprep.subr.mxu0 0.0
        %658 = vmatpush1.msra.mxu0 0.0
        %659 = vmatprep.subr.mxu0 0.0
        %660 = vmatpush1.msra.mxu0 0.0
        %661 = vmatprep.subr.mxu0 0.0
        %662 = vmatpush1.msra.mxu0 0.0
        %663 = vmatprep.subr.mxu0 0.0
        %664 = vmatpush1.msra.mxu0 0.0
        %665 = vmatprep.subr.mxu0 0.0
        %666 = vmatpush1.msra.mxu0 0.0
        %667 = vmatprep.subr.mxu0 0.0
        %668 = vmatpush1.msra.mxu0 0.0
        %669 = vmatprep.subr.mxu0 0.0
        %670 = vmatpush1.msra.mxu0 0.0
        %671 = vmatprep.subr.mxu0 0.0
        %672 = vmatpush1.msra.mxu0 0.0
        %673 = vmatprep.subr.mxu0 0.0
        %674 = vmatpush1.msra.mxu0 0.0
        %675 = vmatprep.subr.mxu0 0.0
        %676 = vmatpush1.msra.mxu0 0.0
        %677 = vmatprep.subr.mxu0 0.0
        %678 = vmatpush1.msra.mxu0 0.0
        %679 = vmatprep.mubr.f32.mxu0 0.0
        %680 = vmatmul.mubr.f32.gmra.mrb[0].mxu0 %v613
        %v681 = vpop.f32.mrb[0].mxu0
        %v682 = vadd.f32 0.0, %v681
        %v683 = vpop.f32.mrb[0].mxu0
        %684 = vdwg.mxu0
        %vm693 = vcmask 1041409
        %v694 = vsel %vm693, %v513, %v512
        %vm695 = vcmask 1042434
        %v696 = vsel %vm695, %v514, %v694
        %vm697 = vcmask 1043459
        %v698 = vsel %vm697, %v515, %v696
        %vm699 = vcmask 1044484
        %v700 = vsel %vm699, %v516, %v698
        %vm701 = vcmask 1045509
        %v702 = vsel %vm701, %v517, %v700
        %vm703 = vcmask 1046534
        %v704 = vsel %vm703, %v518, %v702
        %vm705 = vcmask 1047559
        %v706 = vsel %vm705, %v519, %v704
        %v707 = vsel %vm454, %v706, 0
        %709 = vmatprep.subr.mxu0 0.0
        %710 = vmatpush1.msra.mxu0 %v599
        %711 = vmatprep.subr.mxu0 0.0
        %712 = vmatpush1.msra.mxu0 %v600
        %713 = vmatprep.subr.mxu0 0.0
        %714 = vmatpush1.msra.mxu0 %v601
        %715 = vmatprep.subr.mxu0 0.0
        %716 = vmatpush1.msra.mxu0 %v602
        %717 = vmatprep.subr.mxu0 0.0
        %718 = vmatpush1.msra.mxu0 0.0
        %719 = vmatprep.subr.mxu0 0.0
        %720 = vmatpush1.msra.mxu0 0.0
        %721 = vmatprep.subr.mxu0 0.0
        %722 = vmatpush1.msra.mxu0 0.0
        %723 = vmatprep.subr.mxu0 0.0
        %724 = vmatpush1.msra.mxu0 0.0
        %725 = vmatprep.subr.mxu0 0.0
        %726 = vmatpush1.msra.mxu0 0.0
        %727 = vmatprep.subr.mxu0 0.0
        %728 = vmatpush1.msra.mxu0 0.0
        %729 = vmatprep.subr.mxu0 0.0
        %730 = vmatpush1.msra.mxu0 0.0
        %731 = vmatprep.subr.mxu0 0.0
        %732 = vmatpush1.msra.mxu0 0.0
        %733 = vmatprep.subr.mxu0 0.0
        %734 = vmatpush1.msra.mxu0 0.0
        %735 = vmatprep.subr.mxu0 0.0
        %736 = vmatpush1.msra.mxu0 0.0
        %737 = vmatprep.subr.mxu0 0.0
        %738 = vmatpush1.msra.mxu0 0.0
        %739 = vmatprep.subr.mxu0 0.0
        %740 = vmatpush1.msra.mxu0 0.0
        %741 = vmatprep.subr.mxu0 0.0
        %742 = vmatpush1.msra.mxu0 0.0
        %743 = vmatprep.subr.mxu0 0.0
        %744 = vmatpush1.msra.mxu0 0.0
        %745 = vmatprep.subr.mxu0 0.0
        %746 = vmatpush1.msra.mxu0 0.0
        %747 = vmatprep.subr.mxu0 0.0
        %748 = vmatpush1.msra.mxu0 0.0
        %749 = vmatprep.subr.mxu0 0.0
        %750 = vmatpush1.msra.mxu0 0.0
        %751 = vmatprep.subr.mxu0 0.0
        %752 = vmatpush1.msra.mxu0 0.0
        %753 = vmatprep.subr.mxu0 0.0
        %754 = vmatpush1.msra.mxu0 0.0
        %755 = vmatprep.subr.mxu0 0.0
        %756 = vmatpush1.msra.mxu0 0.0
        %757 = vmatprep.subr.mxu0 0.0
        %758 = vmatpush1.msra.mxu0 0.0
        %759 = vmatprep.subr.mxu0 0.0
        %760 = vmatpush1.msra.mxu0 0.0
        %761 = vmatprep.subr.mxu0 0.0
        %762 = vmatpush1.msra.mxu0 0.0
        %763 = vmatprep.subr.mxu0 0.0
        %764 = vmatpush1.msra.mxu0 0.0
        %765 = vmatprep.subr.mxu0 0.0
        %766 = vmatpush1.msra.mxu0 0.0
        %767 = vmatprep.subr.mxu0 0.0
        %768 = vmatpush1.msra.mxu0 0.0
        %769 = vmatprep.subr.mxu0 0.0
        %770 = vmatpush1.msra.mxu0 0.0
        %771 = vmatprep.subr.mxu0 0.0
        %772 = vmatpush1.msra.mxu0 0.0
        %773 = vmatprep.mubr.f32.mxu0 0.0
        %774 = vmatmul.mubr.f32.gmra.mrb[0].mxu0 %v707
        %v775 = vpop.f32.mrb[0].mxu0
        %v776 = vadd.f32 %v682, %v775
        %v777 = vpop.f32.mrb[0].mxu0
        %778 = vdwg.mxu0
        %v779 = vld [vmem:[%s6] sm:$0x1]
        %v781 = vlaneseq
        %v782 = vshrl.u32 %v781, 7
        %v783 = vsub.s32 0, %v782
        %v784 = vrot.slane %v779, %v783
        %v786 = vadd.f32 %v776, %v784
        %vm787 = vcmask 39936
        %v788 = vsel %vm787, %v786, -inf
        %789 = vmax.xlane.f32.xlu0 %v788
        %v790 = vpop.xlane.xlu0 %789
        %v791 = vsub.f32 %v786, %v790
        %v792 = vmul.f32 %v791, 1.442695
        %v793 = vpow.pop %v792
        %v794 = vsel %vm787, %v793, 0.0
        %795 = vadd.xlane.f32.xlu0 %v794
        %v796 = vpop.xlane.xlu0 %795
        %v797 = vrcp.pop %v796
        %v798 = vmul.f32 %v793, %v797
        %vm799 = vcmask 80936
        %v800 = vsel %vm799, %v786, -inf
        %801 = vmax.xlane.f32.xlu0 %v800
        %v802 = vpop.xlane.xlu0 %801
        %v803 = vsub.f32 %v786, %v802
        %v804 = vmul.f32 %v803, 1.442695
        %v805 = vpow.pop %v804
        %807 = vrot.lane.b32.xlu0 %v805, 123
        %v808 = vpop.permute.xlu0 %807
        %v810 = vsel %vm787, %v808, 0.0
        %811 = vadd.xlane.f32.xlu0 %v810
        %v812 = vpop.xlane.xlu0 %811
        %v813 = vrcp.pop %v812
        %v814 = vmul.f32 %v805, %v813
        %v815 = vsel %vm787, %v798, %v814
        %vm816 = vcmask 80896
        %v817 = vsel %vm816, %v815, 0.0
        %818 = vst [vmem:[%s285] sm:$0xff] %v817
        %s819 = sand.u32 %s186, 1
        %s820 = scalar_lea.sflag [#allocation3], %s819
        %s821 = sand.u32 %s186, 1
        %s822 = smul.addr %s821, 8
        %s823 = scalar_lea.vmem [#allocation2], %s822
        // Predicated region
        $region49: #{tpu_custom_call.1} parent=47 // pred_check
          %p824 = pneg %p196
        $region50: #{tpu_custom_call.1} parent=47 // pred_check_branch
          %826 = sbr.rel (%p824) target = $region52
        $region51: #{tpu_custom_call.1} parent=47 // pred_region
          %s828 = ssub.s32 128, 128
          %829 = vsyncadd %s820, %s828
          %s830 = smul.addr %s21, 128
          %s831 = scalar_lea.hbm %s7, %s830
          %s833 = sshll.u32 %s823, 4
          %s834 = int_to_ptr.vmem [resolvable:$true] %s833
          %836 = dma.vmem_to_hbm [thread:$0]  %s834, 128, %s831, %s820
        $region52: #{tpu_custom_call.1} parent=47 // pred_fallthru
          _
      $region48: #{tpu_custom_call.1} parent=5 // pred_fallthru
        _
      %p837 = scmp.le.s32.totalorder 2, %s16
      // Predicated region
      $region53: #{tpu_custom_call.1} parent=5 // pred_check
        %p838 = pneg %p837
      $region54: #{tpu_custom_call.1} parent=5 // pred_check_branch
        %840 = sbr.rel (%p838) target = $region56
      $region55: #{tpu_custom_call.1} parent=5 // pred_region
        %s841 = ssub.s32 %s16, 2
        // Predicated region
        $region57: #{tpu_custom_call.1} parent=55 // pred_check
          %p842 = pneg %p202
        $region58: #{tpu_custom_call.1} parent=55 // pred_check_branch
          %844 = sbr.rel (%p842) target = $region60
        $region59: #{tpu_custom_call.1} parent=55 // pred_region
          %s845 = sand.u32 %s187, 1
          %s846 = scalar_lea.sflag [#allocation3], %s845
          %s847 = sand.u32 %s187, 1
          %s848 = smul.addr %s847, 8
          %s849 = scalar_lea.vmem [#allocation2], %s848
          %850 = dma.done %s846, 128
        $region60: #{tpu_custom_call.1} parent=55 // pred_fallthru
          _
      $region56: #{tpu_custom_call.1} parent=5 // pred_fallthru
        _
    $region6: #{tpu_custom_call.1} parent=1 // loop_footer
      %s20 = sadd.s32 1, %s16
    $region7: #{tpu_custom_call.1} parent=1 // loop_footer_branch
      %15 = sbr.rel target = $region3
    $region8: #{tpu_custom_call.1} parent=1 // loop_exit
      _
    %851 = vsyncpa [#allocation3], 1
    %s852 = scalar_lea.sflag [#allocation3], 1
    %853 = vsyncpa %s852, 1

</llo_original>
